<compile_context>
chip_gen: v7x
topology: tpu7x:2x2x1
jax: 0.10.0
libtpu: 0.0.40
codegen_flags: <defaults>
</compile_context>

<pallas_src>
import jax
import jax.numpy as jnp
from jax.experimental import pallas as pl
from jax.experimental.pallas import tpu as pltpu

EPS = 1e-6          # VN epsilon (vector-neurons reference code)
BN_EPS = 1e-5       # nn.BatchNorm1d default eps
NEG_SLOPE = 0.2     # VNLeakyReLU default negative_slope


def _round_up(n, m):
    return ((n + m - 1) // m) * m


def _cdiv(a, b):
    return -(-a // b)


def _vmem_capacity_bytes():
    try:
        return int(pltpu.get_tpu_info().vmem_capacity_bytes)
    except Exception:
        return 64 * 1024 * 1024   # conservative fallback (v7x per-core VMEM)


def _fast_recip(x):
    """EUP approximate reciprocal + one Newton step (rel err ~ eps0^2 << 1e-4 tol)."""
    r = pl.reciprocal(x, approx=True)
    return r * (2.0 - x * r)


def vn_residual_block_cm(x_cm, w_dir, w_lin, *, tile_b_max=1024):
    """Component-major entry point.  x_cm: [3, B, C]; returns [3, B, C]."""
    _, B, C = x_cm.shape
    C_pad = _round_up(C, 128)                              # lane-dense channel axis

    # ---- per-generation VMEM budget -> batch tile + scoped-vmem limit -------------
    vmem_cap = _vmem_capacity_bytes()
    vmem_budget = int(vmem_cap * 0.75)
    slab = 4 * C_pad                                       # one f32 row of a [*, C_pad] slab
    fixed = 4 * (2 * C_pad * C_pad + 2 * C_pad)            # single-buffered weights + bn
    per_row = slab * (12 + 16)                             # x/out double-buffered tiles + temps
    tile_b_vmem = max(8, ((vmem_budget - fixed) // per_row) // 8 * 8)

    tile_b_max = max(8, (int(tile_b_max) // 8) * 8)
    tile_b = min(tile_b_max, tile_b_vmem, _round_up(B, 8))
    if B >= 16:
        # keep >= 2 batch tiles so the apply pass's "parallel" axis can split across
        # v7x's two TensorCores
        tile_b = min(tile_b, _round_up(_cdiv(B, 2), 8))
    tile_b = max(8, (tile_b // 8) * 8)

    n_tiles = _cdiv(B, tile_b)
    B_pad = n_tiles * tile_b
    stats_cores = 2 if (n_tiles >= 2 and n_tiles % 2 == 0) else 1
    n_half = n_tiles // stats_cores

    x_p = jnp.pad(x_cm.astype(jnp.float32),
                  ((0, 0), (0, B_pad - B), (0, C_pad - C)))
    # nn.Linear weights are [C_out, C_in]; kernel uses W^T so the dot is y @ W^T.
    wdir_t = jnp.pad(w_dir.T.astype(jnp.float32), ((0, C_pad - C), (0, C_pad - C)))
    wlin_t = jnp.pad(w_lin.T.astype(jnp.float32), ((0, C_pad - C), (0, C_pad - C)))

    # -------- pass 1: global (over B) per-channel stats of ||x|| -------------------
    def stats_kernel(x_ref, stats_ref):
        c = pl.program_id(0)
        i = pl.program_id(1)

        @pl.when(i == 0)
        def _():
            stats_ref[...] = jnp.zeros_like(stats_ref)

        x0 = x_ref[0]
        x1 = x_ref[1]
        x2 = x_ref[2]
        norm = jnp.sqrt(x0 * x0 + x1 * x1 + x2 * x2) + EPS            # [T, C]
        tile_start = (c * n_half + i) * tile_b

        def _accum(nv):
            s = jnp.sum(nv, axis=0, keepdims=True)                    # [1, C]
            sq = jnp.sum(nv * norm, axis=0, keepdims=True)            # [1, C]
            stats_ref[0] += jnp.concatenate([s, sq], axis=0)

        if B_pad == B:
            _accum(norm)                      # no batch padding at all (static fast path)
        else:
            @pl.when(tile_start + tile_b <= B)                        # fully-valid tile
            def _():
                _accum(norm)

            @pl.when(tile_start + tile_b > B)                         # tile with padded rows
            def _():
                row = tile_start + jax.lax.broadcasted_iota(
                    jnp.int32, (tile_b, C_pad), 0)
                _accum(norm * (row < B).astype(jnp.float32))

    stats = pl.pallas_call(
        stats_kernel,
        out_shape=jax.ShapeDtypeStruct((stats_cores, 2, C_pad), jnp.float32),
        grid=(stats_cores, n_half),
        in_specs=[pl.BlockSpec((3, tile_b, C_pad),
                               lambda c, i: (0, c * n_half + i, 0))],
        out_specs=pl.BlockSpec((1, 2, C_pad), lambda c, i: (c, 0, 0)),
        compiler_params=pltpu.CompilerParams(
            dimension_semantics=("parallel", "arbitrary"),
            vmem_limit_bytes=vmem_budget),
        cost_estimate=pl.CostEstimate(
            flops=12 * B_pad * C_pad,
            transcendentals=B_pad * C_pad,
            bytes_accessed=(3 * B_pad * C_pad + 2 * stats_cores * C_pad) * 4),
    )(x_p)

    # tiny epilogue: reduce the per-core partials, finish mean / inv_std
    totals = jnp.sum(stats, axis=0)                                   # [2, C_pad]
    mean = totals[0:1, :] / B
    var = jnp.maximum(totals[1:2, :] / B - mean * mean, 0.0)          # biased batch var
    inv_std = jax.lax.rsqrt(var + BN_EPS)
    bn = jnp.concatenate([mean, inv_std], axis=0)                     # [2, C_pad]

    # -------- pass 2: BN apply + VNLeakyReLU + VNLinear + residual -----------------
    def apply_kernel(bn_ref, x_ref, wdir_ref, wlin_ref, o_ref):
        bn_v = bn_ref[...]
        mean_v = bn_v[0:1, :]                                         # [1, C]
        inv_std_v = bn_v[1:2, :]                                      # [1, C]

        x0 = x_ref[0]
        x1 = x_ref[1]
        x2 = x_ref[2]                                                 # each [T, C]

        # VNBatchNorm: rescale each 3-vector by norm_bn / norm
        norm = jnp.sqrt(x0 * x0 + x1 * x1 + x2 * x2) + EPS
        scale = (norm - mean_v) * inv_std_v * _fast_recip(norm)       # [T, C]
        y0 = x0 * scale
        y1 = x1 * scale
        y2 = x2 * scale

        # VNLeakyReLU direction: per-component MXU matmuls against the resident weight
        # (identical flops to a stacked [3T,C] dot, zero concat/slice slabs).
        wdir = wdir_ref[...]
        d0 = jnp.dot(y0, wdir, preferred_element_type=jnp.float32)
        d1 = jnp.dot(y1, wdir, preferred_element_type=jnp.float32)
        d2 = jnp.dot(y2, wdir, preferred_element_type=jnp.float32)

        dotprod = y0 * d0 + y1 * d1 + y2 * d2                         # [T, C]
        d_norm_sq = d0 * d0 + d1 * d1 + d2 * d2                       # [T, C]
        coef = dotprod * _fast_recip(d_norm_sq + EPS)
        # exact identity:  ns*y+(1-ns)*(m*y+(1-m)*(y-coef*d)) == y-(1-ns)*(1-m)*coef*d
        a = (1.0 - NEG_SLOPE) * jnp.where(dotprod >= 0, 0.0, coef)
        z0 = y0 - a * d0
        z1 = y1 - a * d1
        z2 = y2 - a * d2

        # VNLinear + residual; each result is one lane-dense [T, C_pad] store.
        wlin = wlin_ref[...]
        o_ref[0] = z0 + jnp.dot(z0, wlin, preferred_element_type=jnp.float32)
        o_ref[1] = z1 + jnp.dot(z1, wlin, preferred_element_type=jnp.float32)
        o_ref[2] = z2 + jnp.dot(z2, wlin, preferred_element_type=jnp.float32)

    resident = pl.Buffered(1)          # constant index_map -> no wasted second buffer
    flops = 12 * B_pad * C_pad * C_pad + 40 * 3 * B_pad * C_pad
    bytes_accessed = (2 * 3 * B_pad * C_pad + 2 * C_pad * C_pad + 2 * C_pad) * 4
    out_p = pl.pallas_call(
        apply_kernel,
        out_shape=jax.ShapeDtypeStruct((3, B_pad, C_pad), jnp.float32),
        grid=(n_tiles,),
        in_specs=[
            pl.BlockSpec((2, C_pad), lambda i: (0, 0), pipeline_mode=resident),      # bn
            pl.BlockSpec((3, tile_b, C_pad), lambda i: (0, i, 0)),                   # x tile
            pl.BlockSpec((C_pad, C_pad), lambda i: (0, 0), pipeline_mode=resident),  # W_dir^T
            pl.BlockSpec((C_pad, C_pad), lambda i: (0, 0), pipeline_mode=resident),  # W_lin^T
        ],
        out_specs=pl.BlockSpec((3, tile_b, C_pad), lambda i: (0, i, 0)),
        compiler_params=pltpu.CompilerParams(
            dimension_semantics=("parallel",),
            vmem_limit_bytes=vmem_budget),
        cost_estimate=pl.CostEstimate(flops=flops,
                                      transcendentals=3 * B_pad * C_pad,
                                      bytes_accessed=bytes_accessed),
    )(bn, x_p, wdir_t, wlin_t)

    return out_p[:, :B, :C]


def vn_residual_block(x, w_dir, w_lin, *, tile_b_max=1024):
    """PyTorch-layout entry: x [B, C, 3], weights [C_out, C_in] -> [B, C, 3]."""
    # TODO(synk): amortize this transpose/pad across a whole block stack by staying in the
    # [3, B, C] component-major layout (vn_residual_block_cm) end-to-end.
    x_cm = jnp.transpose(x, (2, 0, 1))                                # [3, B, C]
    out_cm = vn_residual_block_cm(x_cm, w_dir, w_lin, tile_b_max=tile_b_max)
    return jnp.transpose(out_cm, (1, 2, 0))                           # [B, C, 3]


def vn_residual_reference(x, w_dir, w_lin):
    """Pure-JAX reference mirroring the PyTorch forward on [B, C, 3]."""
    norm = jnp.sqrt(jnp.sum(x * x, axis=2)) + EPS                     # [B, C]
    mean = jnp.mean(norm, axis=0)
    var = jnp.mean((norm - mean) ** 2, axis=0)
    norm_bn = (norm - mean) / jnp.sqrt(var + BN_EPS)
    out = x / norm[..., None] * norm_bn[..., None]

    d = jnp.einsum('oc,bck->bok', w_dir, out)
    dotprod = jnp.sum(out * d, axis=2, keepdims=True)
    mask = (dotprod >= 0).astype(x.dtype)
    d_norm_sq = jnp.sum(d * d, axis=2, keepdims=True)
    ns = NEG_SLOPE
    x_out = ns * out + (1 - ns) * (
        mask * out + (1 - mask) * (out - (dotprod / (d_norm_sq + EPS)) * d)
    )
    x0 = jnp.einsum('oc,bck->bok', w_lin, x_out)
    return x_out + x0


if __name__ == "__main__":
    key = jax.random.PRNGKey(0)
    kx, kd, kl, kx2, kx3 = jax.random.split(key, 5)

    B, HIDDEN = 4, 32
    x = jax.random.normal(kx, (B, HIDDEN, 3), dtype=jnp.float32)
    bound = 1.0 / (HIDDEN ** 0.5)   # nn.Linear default init ~ U(-1/sqrt(C), 1/sqrt(C))
    w_dir = jax.random.uniform(kd, (HIDDEN, HIDDEN), jnp.float32, -bound, bound)
    w_lin = jax.random.uniform(kl, (HIDDEN, HIDDEN), jnp.float32, -bound, bound)

    fwd = jax.jit(vn_residual_block, static_argnames=("tile_b_max",))

    out = jax.block_until_ready(fwd(x, w_dir, w_lin))
    ref = jax.block_until_ready(vn_residual_reference(x, w_dir, w_lin))
    assert out.shape == (B, HIDDEN, 3)
    assert jnp.allclose(out, ref, atol=1e-4, rtol=1e-4)

    # second check: multi-tile grid, odd tile count (single-core stats path) + mask path
    B2 = 20
    x2 = jax.random.normal(kx2, (B2, HIDDEN, 3), dtype=jnp.float32)
    out2 = jax.block_until_ready(fwd(x2, w_dir, w_lin, tile_b_max=8))
    ref2 = jax.block_until_ready(vn_residual_reference(x2, w_dir, w_lin))
    assert out2.shape == (B2, HIDDEN, 3)
    assert jnp.allclose(out2, ref2, atol=1e-4, rtol=1e-4)

    # third check: even tile count -> 2-way megacore-split stats grid + last-tile mask
    B3 = 28
    x3 = jax.random.normal(kx3, (B3, HIDDEN, 3), dtype=jnp.float32)
    out3 = jax.block_until_ready(fwd(x3, w_dir, w_lin, tile_b_max=8))
    ref3 = jax.block_until_ready(vn_residual_reference(x3, w_dir, w_lin))
    assert out3.shape == (B3, HIDDEN, 3)
    assert jnp.allclose(out3, ref3, atol=1e-4, rtol=1e-4)

    print("KERNEL_OK")
</pallas_src>

<mosaic_0001>
module attributes {stable_mosaic.version = 11 : i64} {
  func.func @stats_kernel(%arg0: i32, %arg1: i32, %arg2: memref<3x8x128xf32, #tpu.memory_space<vmem>>, %arg3: memref<1x2x128xf32, #tpu.memory_space<vmem>>) attributes {dimension_semantics = [#tpu.dimension_semantics<parallel>, #tpu.dimension_semantics<arbitrary>], iteration_bounds = array<i64: 1, 1>, scalar_prefetch = 0 : i64, scratch_operands = 0 : i64, tpu.core_type = #tpu.core_type<tc>, window_params = [{transform_indices = @transform_0, window_bounds = array<i64: 3, 8, 128>}, {transform_indices = @transform_1, window_bounds = array<i64: 1, 2, 128>}]} {
    %c0_i32 = arith.constant 0 : i32
    %0 = arith.cmpi eq, %arg1, %c0_i32 : i32
    %1 = arith.extui %0 : i1 to i32
    %c0_i32_0 = arith.constant 0 : i32
    %2 = arith.cmpi ne, %1, %c0_i32_0 : i32
    scf.if %2 {
      %cst_12 = arith.constant 0.000000e+00 : f32
      %28 = vector.broadcast %cst_12 : f32 to vector<1x2x128xf32>
      %c0_13 = arith.constant 0 : index
      %c0_14 = arith.constant 0 : index
      %c0_15 = arith.constant 0 : index
      %29 = vector.load %arg3[%c0_13, %c0_14, %c0_15] : memref<1x2x128xf32, #tpu.memory_space<vmem>>, vector<1x2x128xf32>
      tpu.vector_store %arg3[%c0_13, %c0_14, %c0_15], %28 {strides = array<i32>} : memref<1x2x128xf32, #tpu.memory_space<vmem>>, vector<1x2x128xf32>,
    } else {
    }
    %c0 = arith.constant 0 : index
    %c0_1 = arith.constant 0 : index
    %c0_2 = arith.constant 0 : index
    %3 = vector.load %arg2[%c0, %c0_1, %c0_2] : memref<3x8x128xf32, #tpu.memory_space<vmem>>, vector<1x8x128xf32>
    %4 = vector.shape_cast %3 : vector<1x8x128xf32> to vector<8x128xf32>
    %c1 = arith.constant 1 : index
    %c0_3 = arith.constant 0 : index
    %c0_4 = arith.constant 0 : index
    %5 = vector.load %arg2[%c1, %c0_3, %c0_4] : memref<3x8x128xf32, #tpu.memory_space<vmem>>, vector<1x8x128xf32>
    %6 = vector.shape_cast %5 : vector<1x8x128xf32> to vector<8x128xf32>
    %c2 = arith.constant 2 : index
    %c0_5 = arith.constant 0 : index
    %c0_6 = arith.constant 0 : index
    %7 = vector.load %arg2[%c2, %c0_5, %c0_6] : memref<3x8x128xf32, #tpu.memory_space<vmem>>, vector<1x8x128xf32>
    %8 = vector.shape_cast %7 : vector<1x8x128xf32> to vector<8x128xf32>
    %9 = arith.mulf %4, %4 : vector<8x128xf32>
    %10 = arith.mulf %6, %6 : vector<8x128xf32>
    %11 = arith.addf %9, %10 : vector<8x128xf32>
    %12 = arith.mulf %8, %8 : vector<8x128xf32>
    %13 = arith.addf %11, %12 : vector<8x128xf32>
    %14 = math.sqrt %13 : vector<8x128xf32>
    %cst = arith.constant 9.99999997E-7 : f32
    %15 = vector.broadcast %cst : f32 to vector<8x128xf32>
    %16 = arith.addf %14, %15 : vector<8x128xf32>
    %c1_i32 = arith.constant 1 : i32
    %17 = arith.muli %arg0, %c1_i32 : i32
    %18 = arith.addi %17, %arg1 : i32
    %c8_i32 = arith.constant 8 : i32
    %19 = arith.muli %18, %c8_i32 : i32
    %c8_i32_7 = arith.constant 8 : i32
    %20 = arith.addi %19, %c8_i32_7 : i32
    %c4_i32 = arith.constant 4 : i32
    %21 = arith.cmpi sle, %20, %c4_i32 : i32
    %22 = arith.extui %21 : i1 to i32
    %c0_i32_8 = arith.constant 0 : i32
    %23 = arith.cmpi ne, %22, %c0_i32_8 : i32
    scf.if %23 {
      %cst_12 = arith.constant dense<0.000000e+00> : vector<128xf32>
      %28 = vector.multi_reduction <add>, %16, %cst_12 [0] : vector<8x128xf32> to vector<128xf32>
      %29 = vector.shape_cast %28 : vector<128xf32> to vector<1x128xf32>
      %30 = arith.mulf %16, %16 : vector<8x128xf32>
      %cst_13 = arith.constant dense<0.000000e+00> : vector<128xf32>
      %31 = vector.multi_reduction <add>, %30, %cst_13 [0] : vector<8x128xf32> to vector<128xf32>
      %32 = vector.shape_cast %31 : vector<128xf32> to vector<1x128xf32>
      %c0_14 = arith.constant 0 : index
      %c0_15 = arith.constant 0 : index
      %c0_16 = arith.constant 0 : index
      %33 = vector.load %arg3[%c0_14, %c0_15, %c0_16] : memref<1x2x128xf32, #tpu.memory_space<vmem>>, vector<1x2x128xf32>
      %34 = vector.shape_cast %33 : vector<1x2x128xf32> to vector<2x128xf32>
      %35 = tpu.concatenate %29, %32 in 0 : vector<1x128xf32>, vector<1x128xf32> -> vector<2x128xf32>
      %36 = arith.addf %34, %35 : vector<2x128xf32>
      %c0_17 = arith.constant 0 : index
      %c0_18 = arith.constant 0 : index
      %c0_19 = arith.constant 0 : index
      %37 = vector.load %arg3[%c0_17, %c0_18, %c0_19] : memref<1x2x128xf32, #tpu.memory_space<vmem>>, vector<1x2x128xf32>
      %38 = vector.shape_cast %37 : vector<1x2x128xf32> to vector<2x128xf32>
      %39 = vector.shape_cast %36 : vector<2x128xf32> to vector<1x2x128xf32>
      tpu.vector_store %arg3[%c0_17, %c0_18, %c0_19], %39 {strides = array<i32>} : memref<1x2x128xf32, #tpu.memory_space<vmem>>, vector<1x2x128xf32>,
    } else {
    }
    %c8_i32_9 = arith.constant 8 : i32
    %24 = arith.addi %19, %c8_i32_9 : i32
    %c4_i32_10 = arith.constant 4 : i32
    %25 = arith.cmpi sgt, %24, %c4_i32_10 : i32
    %26 = arith.extui %25 : i1 to i32
    %c0_i32_11 = arith.constant 0 : i32
    %27 = arith.cmpi ne, %26, %c0_i32_11 : i32
    scf.if %27 {
      %28 = tpu.iota {dimensions = array<i32: 0>} : vector<8x128xi32>
      %29 = vector.broadcast %19 : i32 to vector<8x128xi32>
      %30 = arith.addi %29, %28 : vector<8x128xi32>
      %c4_i32_12 = arith.constant 4 : i32
      %31 = vector.broadcast %c4_i32_12 : i32 to vector<8x128xi32>
      %32 = arith.cmpi slt, %30, %31 : vector<8x128xi32>
      %33 = arith.extui %32 : vector<8x128xi1> to vector<8x128xi32>
      %34 = arith.sitofp %33 : vector<8x128xi32> to vector<8x128xf32>
      %35 = arith.mulf %16, %34 : vector<8x128xf32>
      %cst_13 = arith.constant dense<0.000000e+00> : vector<128xf32>
      %36 = vector.multi_reduction <add>, %35, %cst_13 [0] : vector<8x128xf32> to vector<128xf32>
      %37 = vector.shape_cast %36 : vector<128xf32> to vector<1x128xf32>
      %38 = arith.mulf %35, %16 : vector<8x128xf32>
      %cst_14 = arith.constant dense<0.000000e+00> : vector<128xf32>
      %39 = vector.multi_reduction <add>, %38, %cst_14 [0] : vector<8x128xf32> to vector<128xf32>
      %40 = vector.shape_cast %39 : vector<128xf32> to vector<1x128xf32>
      %c0_15 = arith.constant 0 : index
      %c0_16 = arith.constant 0 : index
      %c0_17 = arith.constant 0 : index
      %41 = vector.load %arg3[%c0_15, %c0_16, %c0_17] : memref<1x2x128xf32, #tpu.memory_space<vmem>>, vector<1x2x128xf32>
      %42 = vector.shape_cast %41 : vector<1x2x128xf32> to vector<2x128xf32>
      %43 = tpu.concatenate %37, %40 in 0 : vector<1x128xf32>, vector<1x128xf32> -> vector<2x128xf32>
      %44 = arith.addf %42, %43 : vector<2x128xf32>
      %c0_18 = arith.constant 0 : index
      %c0_19 = arith.constant 0 : index
      %c0_20 = arith.constant 0 : index
      %45 = vector.load %arg3[%c0_18, %c0_19, %c0_20] : memref<1x2x128xf32, #tpu.memory_space<vmem>>, vector<1x2x128xf32>
      %46 = vector.shape_cast %45 : vector<1x2x128xf32> to vector<2x128xf32>
      %47 = vector.shape_cast %44 : vector<2x128xf32> to vector<1x2x128xf32>
      tpu.vector_store %arg3[%c0_18, %c0_19, %c0_20], %47 {strides = array<i32>} : memref<1x2x128xf32, #tpu.memory_space<vmem>>, vector<1x2x128xf32>,
    } else {
    }
    return
  }
  func.func @transform_0(%arg0: i32, %arg1: i32) -> (i32, i32, i32) {
    %c1_i32 = arith.constant 1 : i32
    %0 = arith.muli %arg0, %c1_i32 : i32
    %1 = arith.addi %0, %arg1 : i32
    %c0_i32 = arith.constant 0 : i32
    %c0_i32_0 = arith.constant 0 : i32
    %c0_i32_1 = arith.constant 0 : i32
    return %c0_i32, %1, %c0_i32_0 : i32, i32, i32
  }
  func.func @transform_1(%arg0: i32, %arg1: i32) -> (i32, i32, i32) {
    %c0_i32 = arith.constant 0 : i32
    %c0_i32_0 = arith.constant 0 : i32
    %c0_i32_1 = arith.constant 0 : i32
    return %arg0, %c0_i32, %c0_i32_0 : i32, i32, i32
  }
}

module attributes {stable_mosaic.version = 11 : i64} {
  func.func @apply_kernel(%arg0: i32, %arg1: memref<2x128xf32, #tpu.memory_space<vmem>>, %arg2: memref<3x8x128xf32, #tpu.memory_space<vmem>>, %arg3: memref<128x128xf32, #tpu.memory_space<vmem>>, %arg4: memref<128x128xf32, #tpu.memory_space<vmem>>, %arg5: memref<3x8x128xf32, #tpu.memory_space<vmem>>) attributes {dimension_semantics = [#tpu.dimension_semantics<parallel>], iteration_bounds = array<i64: 1>, scalar_prefetch = 0 : i64, scratch_operands = 0 : i64, tpu.core_type = #tpu.core_type<tc>, window_params = [{pipeline_mode = #tpu.pipeline_mode<synchronous>, transform_indices = @transform_0, window_bounds = array<i64: 2, 128>}, {transform_indices = @transform_1, window_bounds = array<i64: 3, 8, 128>}, {pipeline_mode = #tpu.pipeline_mode<synchronous>, transform_indices = @transform_2, window_bounds = array<i64: 128, 128>}, {pipeline_mode = #tpu.pipeline_mode<synchronous>, transform_indices = @transform_3, window_bounds = array<i64: 128, 128>}, {transform_indices = @transform_4, window_bounds = array<i64: 3, 8, 128>}]} {
    %c0 = arith.constant 0 : index
    %c0_0 = arith.constant 0 : index
    %0 = vector.load %arg1[%c0, %c0_0] : memref<2x128xf32, #tpu.memory_space<vmem>>, vector<2x128xf32>
    %1 = vector.extract_strided_slice %0 {offsets = [0, 0], sizes = [1, 128], strides = [1, 1]} : vector<2x128xf32> to vector<1x128xf32>
    %2 = vector.extract_strided_slice %0 {offsets = [1, 0], sizes = [1, 128], strides = [1, 1]} : vector<2x128xf32> to vector<1x128xf32>
    %c0_1 = arith.constant 0 : index
    %c0_2 = arith.constant 0 : index
    %c0_3 = arith.constant 0 : index
    %3 = vector.load %arg2[%c0_1, %c0_2, %c0_3] : memref<3x8x128xf32, #tpu.memory_space<vmem>>, vector<1x8x128xf32>
    %4 = vector.shape_cast %3 : vector<1x8x128xf32> to vector<8x128xf32>
    %c1 = arith.constant 1 : index
    %c0_4 = arith.constant 0 : index
    %c0_5 = arith.constant 0 : index
    %5 = vector.load %arg2[%c1, %c0_4, %c0_5] : memref<3x8x128xf32, #tpu.memory_space<vmem>>, vector<1x8x128xf32>
    %6 = vector.shape_cast %5 : vector<1x8x128xf32> to vector<8x128xf32>
    %c2 = arith.constant 2 : index
    %c0_6 = arith.constant 0 : index
    %c0_7 = arith.constant 0 : index
    %7 = vector.load %arg2[%c2, %c0_6, %c0_7] : memref<3x8x128xf32, #tpu.memory_space<vmem>>, vector<1x8x128xf32>
    %8 = vector.shape_cast %7 : vector<1x8x128xf32> to vector<8x128xf32>
    %9 = arith.mulf %4, %4 : vector<8x128xf32>
    %10 = arith.mulf %6, %6 : vector<8x128xf32>
    %11 = arith.addf %9, %10 : vector<8x128xf32>
    %12 = arith.mulf %8, %8 : vector<8x128xf32>
    %13 = arith.addf %11, %12 : vector<8x128xf32>
    %14 = math.sqrt %13 : vector<8x128xf32>
    %cst = arith.constant 9.99999997E-7 : f32
    %15 = vector.broadcast %cst : f32 to vector<8x128xf32>
    %16 = arith.addf %14, %15 : vector<8x128xf32>
    %17 = vector.broadcast %1 : vector<1x128xf32> to vector<8x128xf32>
    %18 = arith.subf %16, %17 : vector<8x128xf32>
    %19 = vector.broadcast %2 : vector<1x128xf32> to vector<8x128xf32>
    %20 = arith.mulf %18, %19 : vector<8x128xf32>
    %21 = tpu.reciprocal %16 {approx = true} : vector<8x128xf32> -> vector<8x128xf32>
    %22 = arith.mulf %16, %21 : vector<8x128xf32>
    %cst_8 = arith.constant 2.000000e+00 : f32
    %23 = vector.broadcast %cst_8 : f32 to vector<8x128xf32>
    %24 = arith.subf %23, %22 : vector<8x128xf32>
    %25 = arith.mulf %21, %24 : vector<8x128xf32>
    %26 = arith.mulf %20, %25 : vector<8x128xf32>
    %27 = arith.mulf %4, %26 : vector<8x128xf32>
    %28 = arith.mulf %6, %26 : vector<8x128xf32>
    %29 = arith.mulf %8, %26 : vector<8x128xf32>
    %c0_9 = arith.constant 0 : index
    %c0_10 = arith.constant 0 : index
    %30 = vector.load %arg3[%c0_9, %c0_10] : memref<128x128xf32, #tpu.memory_space<vmem>>, vector<128x128xf32>
    %cst_11 = arith.constant dense<0.000000e+00> : vector<8x128xf32>
    %31 = tpu.matmul %27, %30, %cst_11 {dimension_numbers = #tpu.dot_dimension_numbers<[1], [0], [0], [1], [0, 0, 1, 1], [], []>} : vector<8x128xf32>, vector<128x128xf32>, vector<8x128xf32> -> vector<8x128xf32>
    %cst_12 = arith.constant dense<0.000000e+00> : vector<8x128xf32>
    %32 = tpu.matmul %28, %30, %cst_12 {dimension_numbers = #tpu.dot_dimension_numbers<[1], [0], [0], [1], [0, 0, 1, 1], [], []>} : vector<8x128xf32>, vector<128x128xf32>, vector<8x128xf32> -> vector<8x128xf32>
    %cst_13 = arith.constant dense<0.000000e+00> : vector<8x128xf32>
    %33 = tpu.matmul %29, %30, %cst_13 {dimension_numbers = #tpu.dot_dimension_numbers<[1], [0], [0], [1], [0, 0, 1, 1], [], []>} : vector<8x128xf32>, vector<128x128xf32>, vector<8x128xf32> -> vector<8x128xf32>
    %34 = arith.mulf %27, %31 : vector<8x128xf32>
    %35 = arith.mulf %28, %32 : vector<8x128xf32>
    %36 = arith.addf %34, %35 : vector<8x128xf32>
    %37 = arith.mulf %29, %33 : vector<8x128xf32>
    %38 = arith.addf %36, %37 : vector<8x128xf32>
    %39 = arith.mulf %31, %31 : vector<8x128xf32>
    %40 = arith.mulf %32, %32 : vector<8x128xf32>
    %41 = arith.addf %39, %40 : vector<8x128xf32>
    %42 = arith.mulf %33, %33 : vector<8x128xf32>
    %43 = arith.addf %41, %42 : vector<8x128xf32>
    %cst_14 = arith.constant 9.99999997E-7 : f32
    %44 = vector.broadcast %cst_14 : f32 to vector<8x128xf32>
    %45 = arith.addf %43, %44 : vector<8x128xf32>
    %46 = tpu.reciprocal %45 {approx = true} : vector<8x128xf32> -> vector<8x128xf32>
    %47 = arith.mulf %45, %46 : vector<8x128xf32>
    %cst_15 = arith.constant 2.000000e+00 : f32
    %48 = vector.broadcast %cst_15 : f32 to vector<8x128xf32>
    %49 = arith.subf %48, %47 : vector<8x128xf32>
    %50 = arith.mulf %46, %49 : vector<8x128xf32>
    %51 = arith.mulf %38, %50 : vector<8x128xf32>
    %cst_16 = arith.constant 0.000000e+00 : f32
    %52 = vector.broadcast %cst_16 : f32 to vector<8x128xf32>
    %53 = arith.cmpf oge, %38, %52 : vector<8x128xf32>
    %cst_17 = arith.constant 0.000000e+00 : f32
    %54 = vector.broadcast %cst_17 : f32 to vector<8x128xf32>
    %55 = arith.select %53, %54, %51 : vector<8x128xi1>, vector<8x128xf32>
    %cst_18 = arith.constant 8.000000e-01 : f32
    %56 = vector.broadcast %cst_18 : f32 to vector<8x128xf32>
    %57 = arith.mulf %56, %55 : vector<8x128xf32>
    %58 = arith.mulf %57, %31 : vector<8x128xf32>
    %59 = arith.subf %27, %58 : vector<8x128xf32>
    %60 = arith.mulf %57, %32 : vector<8x128xf32>
    %61 = arith.subf %28, %60 : vector<8x128xf32>
    %62 = arith.mulf %57, %33 : vector<8x128xf32>
    %63 = arith.subf %29, %62 : vector<8x128xf32>
    %c0_19 = arith.constant 0 : index
    %c0_20 = arith.constant 0 : index
    %64 = vector.load %arg4[%c0_19, %c0_20] : memref<128x128xf32, #tpu.memory_space<vmem>>, vector<128x128xf32>
    %cst_21 = arith.constant dense<0.000000e+00> : vector<8x128xf32>
    %65 = tpu.matmul %59, %64, %cst_21 {dimension_numbers = #tpu.dot_dimension_numbers<[1], [0], [0], [1], [0, 0, 1, 1], [], []>} : vector<8x128xf32>, vector<128x128xf32>, vector<8x128xf32> -> vector<8x128xf32>
    %66 = arith.addf %59, %65 : vector<8x128xf32>
    %c0_22 = arith.constant 0 : index
    %c0_23 = arith.constant 0 : index
    %c0_24 = arith.constant 0 : index
    %67 = vector.load %arg5[%c0_22, %c0_23, %c0_24] : memref<3x8x128xf32, #tpu.memory_space<vmem>>, vector<1x8x128xf32>
    %68 = vector.shape_cast %67 : vector<1x8x128xf32> to vector<8x128xf32>
    %69 = vector.shape_cast %66 : vector<8x128xf32> to vector<1x8x128xf32>
    tpu.vector_store %arg5[%c0_22, %c0_23, %c0_24], %69 {strides = array<i32>} : memref<3x8x128xf32, #tpu.memory_space<vmem>>, vector<1x8x128xf32>,
    %cst_25 = arith.constant dense<0.000000e+00> : vector<8x128xf32>
    %70 = tpu.matmul %61, %64, %cst_25 {dimension_numbers = #tpu.dot_dimension_numbers<[1], [0], [0], [1], [0, 0, 1, 1], [], []>} : vector<8x128xf32>, vector<128x128xf32>, vector<8x128xf32> -> vector<8x128xf32>
    %71 = arith.addf %61, %70 : vector<8x128xf32>
    %c1_26 = arith.constant 1 : index
    %c0_27 = arith.constant 0 : index
    %c0_28 = arith.constant 0 : index
    %72 = vector.load %arg5[%c1_26, %c0_27, %c0_28] : memref<3x8x128xf32, #tpu.memory_space<vmem>>, vector<1x8x128xf32>
    %73 = vector.shape_cast %72 : vector<1x8x128xf32> to vector<8x128xf32>
    %74 = vector.shape_cast %71 : vector<8x128xf32> to vector<1x8x128xf32>
    tpu.vector_store %arg5[%c1_26, %c0_27, %c0_28], %74 {strides = array<i32>} : memref<3x8x128xf32, #tpu.memory_space<vmem>>, vector<1x8x128xf32>,
    %cst_29 = arith.constant dense<0.000000e+00> : vector<8x128xf32>
    %75 = tpu.matmul %63, %64, %cst_29 {dimension_numbers = #tpu.dot_dimension_numbers<[1], [0], [0], [1], [0, 0, 1, 1], [], []>} : vector<8x128xf32>, vector<128x128xf32>, vector<8x128xf32> -> vector<8x128xf32>
    %76 = arith.addf %63, %75 : vector<8x128xf32>
    %c2_30 = arith.constant 2 : index
    %c0_31 = arith.constant 0 : index
    %c0_32 = arith.constant 0 : index
    %77 = vector.load %arg5[%c2_30, %c0_31, %c0_32] : memref<3x8x128xf32, #tpu.memory_space<vmem>>, vector<1x8x128xf32>
    %78 = vector.shape_cast %77 : vector<1x8x128xf32> to vector<8x128xf32>
    %79 = vector.shape_cast %76 : vector<8x128xf32> to vector<1x8x128xf32>
    tpu.vector_store %arg5[%c2_30, %c0_31, %c0_32], %79 {strides = array<i32>} : memref<3x8x128xf32, #tpu.memory_space<vmem>>, vector<1x8x128xf32>,
    return
  }
  func.func @transform_0(%arg0: i32) -> (i32, i32) {
    %c0_i32 = arith.constant 0 : i32
    %c0_i32_0 = arith.constant 0 : i32
    %c0_i32_1 = arith.constant 0 : i32
    return %c0_i32, %c0_i32_0 : i32, i32
  }
  func.func @transform_1(%arg0: i32) -> (i32, i32, i32) {
    %c0_i32 = arith.constant 0 : i32
    %c0_i32_0 = arith.constant 0 : i32
    %c0_i32_1 = arith.constant 0 : i32
    return %c0_i32, %arg0, %c0_i32_0 : i32, i32, i32
  }
  func.func @transform_2(%arg0: i32) -> (i32, i32) {
    %c0_i32 = arith.constant 0 : i32
    %c0_i32_0 = arith.constant 0 : i32
    %c0_i32_1 = arith.constant 0 : i32
    return %c0_i32, %c0_i32_0 : i32, i32
  }
  func.func @transform_3(%arg0: i32) -> (i32, i32) {
    %c0_i32 = arith.constant 0 : i32
    %c0_i32_0 = arith.constant 0 : i32
    %c0_i32_1 = arith.constant 0 : i32
    return %c0_i32, %c0_i32_0 : i32, i32
  }
  func.func @transform_4(%arg0: i32) -> (i32, i32, i32) {
    %c0_i32 = arith.constant 0 : i32
    %c0_i32_0 = arith.constant 0 : i32
    %c0_i32_1 = arith.constant 0 : i32
    return %c0_i32, %arg0, %c0_i32_0 : i32, i32, i32
  }
}

</mosaic_0001>

<llo_original>
// kernel: vn_residual_block.2
$region0: #{vn_residual_block.2}
  #allocation0 [shape = 'u32[]', space=smem, size = 0x4, offset = 0x4, fixed_abs, tag = 'smem constant byte address 0x4 - core index']
  #allocation1 [shape = 'u32[144,128]{1,0:T(1,128)}', space=vmem, size = 0x12000, scoped, tag = 'internal scratch']
  %s0 = inlined_call_operand.vmem [shape: f32[3,8,128], index: 0, kind: input, shape index: {}]
  %s1 = inlined_call_operand.vmem [shape: f32[1,2,128], index: 1, kind: output, shape index: {}]
  %s2 = sld [smem:[#allocation0]]
  $region26: #{vn_residual_block.2} parent=0
    _
  %s4 = ssub.s32 1, %s2
  %s5 = scalar_select 0, %s4, %s2
  // Predicated region
  $region2: #{vn_residual_block.2} parent=0 // pred_check
    _
  $region3: #{vn_residual_block.2} parent=0 // pred_check_branch
    %7 = sbr.rel (0) target = $region5
  $region4: #{vn_residual_block.2} parent=0 // pred_region
    %s8 = sadd.s32 0, 0
    %p9 = scmp.lt.s32.totalorder %s8, 0
    %s10 = scalar_select %p9, %s8, 0
    %s11 = smul.addr %s10, 8
    %s12 = scalar_lea.vmem %s0, %s11
    %s13 = sadd.s32 0, 0
  $region5: #{vn_residual_block.2} parent=0 // pred_fallthru
    _
  %s14 = sadd.s32 0, 0
  %p15 = scmp.lt.s32.totalorder %s14, 0
  %s16 = scalar_select %p15, %s14, 0
  %s17 = smul.addr %s16, 8
  %s18 = scalar_lea.vmem %s0, %s17
  %s19 = sadd.s32 0, 0
  %p20 = scmp.lt.s32.totalorder %s19, 0
  %s21 = scalar_select %p20, %s19, 0
  %s22 = smul.addr %s21, 8
  %s23 = scalar_lea.vmem %s0, %s22
  %s24 = sadd.s32 0, 0
  %p25 = scmp.eq.s32.totalorder 0, 0
  // Predicated region
  $region6: #{vn_residual_block.2} parent=0 // pred_check
    %p26 = pneg %p25
  $region7: #{vn_residual_block.2} parent=0 // pred_check_branch
    %28 = sbr.rel (%p26) target = $region9
  $region8: #{vn_residual_block.2} parent=0 // pred_region
    %29 = vst [vmem:[%s1] sm:$0x3] 0.0
  $region9: #{vn_residual_block.2} parent=0 // pred_fallthru
    _
  %v30 = vld [vmem:[%s23] sm:$0xff]
  %s31 = scalar_lea.vmem %s23, 8
  %v32 = vld [vmem:[%s31] sm:$0xff]
  %s33 = scalar_lea.vmem %s23, 16
  %v34 = vld [vmem:[%s33] sm:$0xff]
  %v35 = vmul.f32 %v30, %v30
  %v36 = vmul.f32 %v32, %v32
  %v37 = vadd.f32 %v35, %v36
  %v38 = vmul.f32 %v34, %v34
  %v39 = vadd.f32 %v37, %v38
  %v40 = vrsqrt.pop %v39
  %v41 = vmul.f32 %v39, %v40
  %vm42 = vcmp.eq.f32.partialorder %v39, inf
  %v43 = vsel %vm42, %v39, %v41
  %vm44 = vcmp.eq.f32.partialorder %v39, 0.0
  %v45 = vand.u32 %v39, 2147483648
  %v46 = vsel %vm44, %v45, %v43
  %v47 = vadd.f32 %v46, 1e-06
  %s48 = sadd.s32 0, 0
  %s49 = smul.u32 %s48, 8
  %s50 = sadd.s32 %s49, 8
  %p51 = scmp.le.s32.totalorder %s50, 4
  // Predicated region
  $region10: #{vn_residual_block.2} parent=0 // pred_check
    %p52 = pneg %p51
  $region11: #{vn_residual_block.2} parent=0 // pred_check_branch
    %54 = sbr.rel (%p52) target = $region13
  $region12: #{vn_residual_block.2} parent=0 // pred_region
    %v55 = vrot.slane %v47, 4
    %v56 = vadd.f32 %v47, %v55
    %v57 = vrot.slane %v56, 2
    %v58 = vadd.f32 %v56, %v57
    %v59 = vrot.slane %v58, 1
    %v60 = vadd.f32 %v58, %v59
    %v61 = vmul.f32 %v47, %v47
    %v62 = vrot.slane %v61, 4
    %v63 = vadd.f32 %v61, %v62
    %v64 = vrot.slane %v63, 2
    %v65 = vadd.f32 %v63, %v64
    %v66 = vrot.slane %v65, 1
    %v67 = vadd.f32 %v65, %v66
    %v68 = vld [vmem:[%s1] sm:$0x3]
    %vm69 = vcmask 1040384
    %v70 = vsel %vm69, %v60, %v67
    %v71 = vadd.f32 %v68, %v70
    %72 = vst [vmem:[%s1] sm:$0x3] %v71
  $region13: #{vn_residual_block.2} parent=0 // pred_fallthru
    _
  %p73 = scmp.gt.s32.totalorder %s50, 4
  // Predicated region
  $region14: #{vn_residual_block.2} parent=0 // pred_check
    %p74 = pneg %p73
  $region15: #{vn_residual_block.2} parent=0 // pred_check_branch
    %76 = sbr.rel (%p74) target = $region17
  $region16: #{vn_residual_block.2} parent=0 // pred_region
    %v77 = vlaneseq
    %v78 = vshrl.u32 %v77, 7
    %v79 = vstv %s49
    %v80 = vadd.s32 %v79, %v78
    %vm81 = vcmp.lt.s32.totalorder %v80, 4
    %v82 = vsel %vm81, 1, 0
    %v83 = vcvt.s32.f32 %v82
    %v84 = vmul.f32 %v47, %v83
    %v85 = vrot.slane %v84, 4
    %v86 = vadd.f32 %v84, %v85
    %v87 = vrot.slane %v86, 2
    %v88 = vadd.f32 %v86, %v87
    %v89 = vrot.slane %v88, 1
    %v90 = vadd.f32 %v88, %v89
    %v91 = vmul.f32 %v84, %v47
    %v92 = vrot.slane %v91, 4
    %v93 = vadd.f32 %v91, %v92
    %v94 = vrot.slane %v93, 2
    %v95 = vadd.f32 %v93, %v94
    %v96 = vrot.slane %v95, 1
    %v97 = vadd.f32 %v95, %v96
    %v98 = vld [vmem:[%s1] sm:$0x3]
    %vm99 = vcmask 1040384
    %v100 = vsel %vm99, %v90, %v97
    %v101 = vadd.f32 %v98, %v100
    %102 = vst [vmem:[%s1] sm:$0x3] %v101
  $region17: #{vn_residual_block.2} parent=0 // pred_fallthru
    _
  // Predicated region
  $region18: #{vn_residual_block.2} parent=0 // pred_check
    _
  $region19: #{vn_residual_block.2} parent=0 // pred_check_branch
    %104 = sbr.rel (0) target = $region21
  $region20: #{vn_residual_block.2} parent=0 // pred_region
    _
  $region21: #{vn_residual_block.2} parent=0 // pred_fallthru
    _
  // Predicated region
  $region22: #{vn_residual_block.2} parent=0 // pred_check
    _
  $region23: #{vn_residual_block.2} parent=0 // pred_check_branch
    %106 = sbr.rel (0) target = $region25
  $region24: #{vn_residual_block.2} parent=0 // pred_region
    _
  $region25: #{vn_residual_block.2} parent=0 // pred_fallthru
    _

// kernel: vn_residual_block.3
$region0: #{vn_residual_block.3}
  #allocation0 [shape = 'u32[]', space=smem, size = 0x4, offset = 0x4, fixed_abs, tag = 'smem constant byte address 0x4 - core index']
  #allocation1 [shape = 'u32[144,128]{1,0:T(1,128)}', space=vmem, size = 0x12000, scoped, tag = 'internal scratch']
  %s0 = inlined_call_operand.vmem [shape: f32[2,128], index: 0, kind: input, shape index: {}]
  %s1 = inlined_call_operand.vmem [shape: f32[3,8,128], index: 1, kind: input, shape index: {}]
  %s2 = inlined_call_operand.vmem [shape: f32[128,128], index: 2, kind: input, shape index: {}]
  %s3 = inlined_call_operand.vmem [shape: f32[128,128], index: 3, kind: input, shape index: {}]
  %s4 = inlined_call_operand.vmem [shape: f32[3,8,128], index: 4, kind: output, shape index: {}]
  %s5 = sld [smem:[#allocation0]]
  $region26: #{vn_residual_block.3} parent=0
    _
  %s7 = ssub.s32 1, %s5
  %s8 = scalar_select 0, %s7, %s5
  // Predicated region
  $region2: #{vn_residual_block.3} parent=0 // pred_check
    _
  $region3: #{vn_residual_block.3} parent=0 // pred_check_branch
    %10 = sbr.rel (0) target = $region5
  $region4: #{vn_residual_block.3} parent=0 // pred_region
    _
  $region5: #{vn_residual_block.3} parent=0 // pred_fallthru
    _
  // Predicated region
  $region6: #{vn_residual_block.3} parent=0 // pred_check
    _
  $region7: #{vn_residual_block.3} parent=0 // pred_check_branch
    %12 = sbr.rel (0) target = $region9
  $region8: #{vn_residual_block.3} parent=0 // pred_region
    _
  $region9: #{vn_residual_block.3} parent=0 // pred_fallthru
    _
  // Predicated region
  $region10: #{vn_residual_block.3} parent=0 // pred_check
    _
  $region11: #{vn_residual_block.3} parent=0 // pred_check_branch
    %14 = sbr.rel (0) target = $region13
  $region12: #{vn_residual_block.3} parent=0 // pred_region
    _
  $region13: #{vn_residual_block.3} parent=0 // pred_fallthru
    _
  // Predicated region
  $region14: #{vn_residual_block.3} parent=0 // pred_check
    _
  $region15: #{vn_residual_block.3} parent=0 // pred_check_branch
    %16 = sbr.rel (0) target = $region17
  $region16: #{vn_residual_block.3} parent=0 // pred_region
    _
  $region17: #{vn_residual_block.3} parent=0 // pred_fallthru
    _
  %v17 = vld [vmem:[%s0] sm:$0x3]
  %v18 = vld [vmem:[%s1] sm:$0xff]
  %s19 = scalar_lea.vmem %s1, 8
  %v20 = vld [vmem:[%s19] sm:$0xff]
  %s21 = scalar_lea.vmem %s1, 16
  %v22 = vld [vmem:[%s21] sm:$0xff]
  %v23 = vmul.f32 %v18, %v18
  %v24 = vmul.f32 %v20, %v20
  %v25 = vadd.f32 %v23, %v24
  %v26 = vmul.f32 %v22, %v22
  %v27 = vadd.f32 %v25, %v26
  %v28 = vrsqrt.pop %v27
  %v29 = vmul.f32 %v27, %v28
  %vm30 = vcmp.eq.f32.partialorder %v27, inf
  %v31 = vsel %vm30, %v27, %v29
  %vm32 = vcmp.eq.f32.partialorder %v27, 0.0
  %v33 = vand.u32 %v27, 2147483648
  %v34 = vsel %vm32, %v33, %v31
  %v35 = vadd.f32 %v34, 1e-06
  %v36 = vlaneseq
  %v37 = vshrl.u32 %v36, 7
  %v38 = vsub.s32 0, %v37
  %v39 = vrot.slane %v17, %v38
  %v40 = vsub.f32 %v35, %v39
  %v41 = vlaneseq
  %v42 = vshrl.u32 %v41, 7
  %v43 = vsub.s32 1, %v42
  %v44 = vrot.slane %v17, %v43
  %v45 = vmul.f32 %v40, %v44
  %v46 = vrcp.pop %v35
  %v47 = vmul.f32 %v35, %v46
  %v48 = vsub.f32 2.0, %v47
  %v49 = vmul.f32 %v46, %v48
  %v50 = vmul.f32 %v45, %v49
  %v51 = vmul.f32 %v18, %v50
  %v52 = vmul.f32 %v20, %v50
  %v53 = vmul.f32 %v22, %v50
  %v54 = vld [vmem:[%s2] sm:$0xff]
  %v55 = vld [vmem:[%s2 + $0x8] sm:$0xff]
  %v56 = vld [vmem:[%s2 + $0x10] sm:$0xff]
  %v57 = vld [vmem:[%s2 + $0x18] sm:$0xff]
  %v58 = vld [vmem:[%s2 + $0x20] sm:$0xff]
  %v59 = vld [vmem:[%s2 + $0x28] sm:$0xff]
  %v60 = vld [vmem:[%s2 + $0x30] sm:$0xff]
  %v61 = vld [vmem:[%s2 + $0x38] sm:$0xff]
  %v62 = vld [vmem:[%s2 + $0x40] sm:$0xff]
  %v63 = vld [vmem:[%s2 + $0x48] sm:$0xff]
  %v64 = vld [vmem:[%s2 + $0x50] sm:$0xff]
  %v65 = vld [vmem:[%s2 + $0x58] sm:$0xff]
  %v66 = vld [vmem:[%s2 + $0x60] sm:$0xff]
  %v67 = vld [vmem:[%s2 + $0x68] sm:$0xff]
  %v68 = vld [vmem:[%s2 + $0x70] sm:$0xff]
  %v69 = vld [vmem:[%s2 + $0x78] sm:$0xff]
  %70 = vmatprep.subr.mxu0 0.0
  %71 = vmatpush1.msra.mxu0 %v54
  %72 = vmatprep.subr.mxu0 0.0
  %73 = vmatpush1.msra.mxu0 %v55
  %74 = vmatprep.subr.mxu0 0.0
  %75 = vmatpush1.msra.mxu0 %v56
  %76 = vmatprep.subr.mxu0 0.0
  %77 = vmatpush1.msra.mxu0 %v57
  %78 = vmatprep.subr.mxu0 0.0
  %79 = vmatpush1.msra.mxu0 %v58
  %80 = vmatprep.subr.mxu0 0.0
  %81 = vmatpush1.msra.mxu0 %v59
  %82 = vmatprep.subr.mxu0 0.0
  %83 = vmatpush1.msra.mxu0 %v60
  %84 = vmatprep.subr.mxu0 0.0
  %85 = vmatpush1.msra.mxu0 %v61
  %86 = vmatprep.subr.mxu0 0.0
  %87 = vmatpush1.msra.mxu0 %v62
  %88 = vmatprep.subr.mxu0 0.0
  %89 = vmatpush1.msra.mxu0 %v63
  %90 = vmatprep.subr.mxu0 0.0
  %91 = vmatpush1.msra.mxu0 %v64
  %92 = vmatprep.subr.mxu0 0.0
  %93 = vmatpush1.msra.mxu0 %v65
  %94 = vmatprep.subr.mxu0 0.0
  %95 = vmatpush1.msra.mxu0 %v66
  %96 = vmatprep.subr.mxu0 0.0
  %97 = vmatpush1.msra.mxu0 %v67
  %98 = vmatprep.subr.mxu0 0.0
  %99 = vmatpush1.msra.mxu0 %v68
  %100 = vmatprep.subr.mxu0 0.0
  %101 = vmatpush1.msra.mxu0 %v69
  %102 = vmatprep.subr.mxu0 0.0
  %103 = vmatpush1.msra.mxu0 0.0
  %104 = vmatprep.subr.mxu0 0.0
  %105 = vmatpush1.msra.mxu0 0.0
  %106 = vmatprep.subr.mxu0 0.0
  %107 = vmatpush1.msra.mxu0 0.0
  %108 = vmatprep.subr.mxu0 0.0
  %109 = vmatpush1.msra.mxu0 0.0
  %110 = vmatprep.subr.mxu0 0.0
  %111 = vmatpush1.msra.mxu0 0.0
  %112 = vmatprep.subr.mxu0 0.0
  %113 = vmatpush1.msra.mxu0 0.0
  %114 = vmatprep.subr.mxu0 0.0
  %115 = vmatpush1.msra.mxu0 0.0
  %116 = vmatprep.subr.mxu0 0.0
  %117 = vmatpush1.msra.mxu0 0.0
  %118 = vmatprep.subr.mxu0 0.0
  %119 = vmatpush1.msra.mxu0 0.0
  %120 = vmatprep.subr.mxu0 0.0
  %121 = vmatpush1.msra.mxu0 0.0
  %122 = vmatprep.subr.mxu0 0.0
  %123 = vmatpush1.msra.mxu0 0.0
  %124 = vmatprep.subr.mxu0 0.0
  %125 = vmatpush1.msra.mxu0 0.0
  %126 = vmatprep.subr.mxu0 0.0
  %127 = vmatpush1.msra.mxu0 0.0
  %128 = vmatprep.subr.mxu0 0.0
  %129 = vmatpush1.msra.mxu0 0.0
  %130 = vmatprep.subr.mxu0 0.0
  %131 = vmatpush1.msra.mxu0 0.0
  %132 = vmatprep.subr.mxu0 0.0
  %133 = vmatpush1.msra.mxu0 0.0
  %134 = vmatprep.mubr.f32.mxu0 0.0
  %135 = vmatmul.mubr.f32.gmra.mrb[0].mxu0 %v51
  %v136 = vpop.f32.mrb[0].mxu0
  %v137 = vadd.f32 0.0, %v136
  %v138 = vpop.f32.mrb[0].mxu0
  %139 = vdwg.mxu0
  %140 = vmatprep.subr.mxu0 0.0
  %141 = vmatpush1.msra.mxu0 %v54
  %142 = vmatprep.subr.mxu0 0.0
  %143 = vmatpush1.msra.mxu0 %v55
  %144 = vmatprep.subr.mxu0 0.0
  %145 = vmatpush1.msra.mxu0 %v56
  %146 = vmatprep.subr.mxu0 0.0
  %147 = vmatpush1.msra.mxu0 %v57
  %148 = vmatprep.subr.mxu0 0.0
  %149 = vmatpush1.msra.mxu0 %v58
  %150 = vmatprep.subr.mxu0 0.0
  %151 = vmatpush1.msra.mxu0 %v59
  %152 = vmatprep.subr.mxu0 0.0
  %153 = vmatpush1.msra.mxu0 %v60
  %154 = vmatprep.subr.mxu0 0.0
  %155 = vmatpush1.msra.mxu0 %v61
  %156 = vmatprep.subr.mxu0 0.0
  %157 = vmatpush1.msra.mxu0 %v62
  %158 = vmatprep.subr.mxu0 0.0
  %159 = vmatpush1.msra.mxu0 %v63
  %160 = vmatprep.subr.mxu0 0.0
  %161 = vmatpush1.msra.mxu0 %v64
  %162 = vmatprep.subr.mxu0 0.0
  %163 = vmatpush1.msra.mxu0 %v65
  %164 = vmatprep.subr.mxu0 0.0
  %165 = vmatpush1.msra.mxu0 %v66
  %166 = vmatprep.subr.mxu0 0.0
  %167 = vmatpush1.msra.mxu0 %v67
  %168 = vmatprep.subr.mxu0 0.0
  %169 = vmatpush1.msra.mxu0 %v68
  %170 = vmatprep.subr.mxu0 0.0
  %171 = vmatpush1.msra.mxu0 %v69
  %172 = vmatprep.subr.mxu0 0.0
  %173 = vmatpush1.msra.mxu0 0.0
  %174 = vmatprep.subr.mxu0 0.0
  %175 = vmatpush1.msra.mxu0 0.0
  %176 = vmatprep.subr.mxu0 0.0
  %177 = vmatpush1.msra.mxu0 0.0
  %178 = vmatprep.subr.mxu0 0.0
  %179 = vmatpush1.msra.mxu0 0.0
  %180 = vmatprep.subr.mxu0 0.0
  %181 = vmatpush1.msra.mxu0 0.0
  %182 = vmatprep.subr.mxu0 0.0
  %183 = vmatpush1.msra.mxu0 0.0
  %184 = vmatprep.subr.mxu0 0.0
  %185 = vmatpush1.msra.mxu0 0.0
  %186 = vmatprep.subr.mxu0 0.0
  %187 = vmatpush1.msra.mxu0 0.0
  %188 = vmatprep.subr.mxu0 0.0
  %189 = vmatpush1.msra.mxu0 0.0
  %190 = vmatprep.subr.mxu0 0.0
  %191 = vmatpush1.msra.mxu0 0.0
  %192 = vmatprep.subr.mxu0 0.0
  %193 = vmatpush1.msra.mxu0 0.0
  %194 = vmatprep.subr.mxu0 0.0
  %195 = vmatpush1.msra.mxu0 0.0
  %196 = vmatprep.subr.mxu0 0.0
  %197 = vmatpush1.msra.mxu0 0.0
  %198 = vmatprep.subr.mxu0 0.0
  %199 = vmatpush1.msra.mxu0 0.0
  %200 = vmatprep.subr.mxu0 0.0
  %201 = vmatpush1.msra.mxu0 0.0
  %202 = vmatprep.subr.mxu0 0.0
  %203 = vmatpush1.msra.mxu0 0.0
  %204 = vmatprep.mubr.f32.mxu0 0.0
  %205 = vmatmul.mubr.f32.gmra.mrb[0].mxu0 %v52
  %v206 = vpop.f32.mrb[0].mxu0
  %v207 = vadd.f32 0.0, %v206
  %v208 = vpop.f32.mrb[0].mxu0
  %209 = vdwg.mxu0
  %210 = vmatprep.subr.mxu0 0.0
  %211 = vmatpush1.msra.mxu0 %v54
  %212 = vmatprep.subr.mxu0 0.0
  %213 = vmatpush1.msra.mxu0 %v55
  %214 = vmatprep.subr.mxu0 0.0
  %215 = vmatpush1.msra.mxu0 %v56
  %216 = vmatprep.subr.mxu0 0.0
  %217 = vmatpush1.msra.mxu0 %v57
  %218 = vmatprep.subr.mxu0 0.0
  %219 = vmatpush1.msra.mxu0 %v58
  %220 = vmatprep.subr.mxu0 0.0
  %221 = vmatpush1.msra.mxu0 %v59
  %222 = vmatprep.subr.mxu0 0.0
  %223 = vmatpush1.msra.mxu0 %v60
  %224 = vmatprep.subr.mxu0 0.0
  %225 = vmatpush1.msra.mxu0 %v61
  %226 = vmatprep.subr.mxu0 0.0
  %227 = vmatpush1.msra.mxu0 %v62
  %228 = vmatprep.subr.mxu0 0.0
  %229 = vmatpush1.msra.mxu0 %v63
  %230 = vmatprep.subr.mxu0 0.0
  %231 = vmatpush1.msra.mxu0 %v64
  %232 = vmatprep.subr.mxu0 0.0
  %233 = vmatpush1.msra.mxu0 %v65
  %234 = vmatprep.subr.mxu0 0.0
  %235 = vmatpush1.msra.mxu0 %v66
  %236 = vmatprep.subr.mxu0 0.0
  %237 = vmatpush1.msra.mxu0 %v67
  %238 = vmatprep.subr.mxu0 0.0
  %239 = vmatpush1.msra.mxu0 %v68
  %240 = vmatprep.subr.mxu0 0.0
  %241 = vmatpush1.msra.mxu0 %v69
  %242 = vmatprep.subr.mxu0 0.0
  %243 = vmatpush1.msra.mxu0 0.0
  %244 = vmatprep.subr.mxu0 0.0
  %245 = vmatpush1.msra.mxu0 0.0
  %246 = vmatprep.subr.mxu0 0.0
  %247 = vmatpush1.msra.mxu0 0.0
  %248 = vmatprep.subr.mxu0 0.0
  %249 = vmatpush1.msra.mxu0 0.0
  %250 = vmatprep.subr.mxu0 0.0
  %251 = vmatpush1.msra.mxu0 0.0
  %252 = vmatprep.subr.mxu0 0.0
  %253 = vmatpush1.msra.mxu0 0.0
  %254 = vmatprep.subr.mxu0 0.0
  %255 = vmatpush1.msra.mxu0 0.0
  %256 = vmatprep.subr.mxu0 0.0
  %257 = vmatpush1.msra.mxu0 0.0
  %258 = vmatprep.subr.mxu0 0.0
  %259 = vmatpush1.msra.mxu0 0.0
  %260 = vmatprep.subr.mxu0 0.0
  %261 = vmatpush1.msra.mxu0 0.0
  %262 = vmatprep.subr.mxu0 0.0
  %263 = vmatpush1.msra.mxu0 0.0
  %264 = vmatprep.subr.mxu0 0.0
  %265 = vmatpush1.msra.mxu0 0.0
  %266 = vmatprep.subr.mxu0 0.0
  %267 = vmatpush1.msra.mxu0 0.0
  %268 = vmatprep.subr.mxu0 0.0
  %269 = vmatpush1.msra.mxu0 0.0
  %270 = vmatprep.subr.mxu0 0.0
  %271 = vmatpush1.msra.mxu0 0.0
  %272 = vmatprep.subr.mxu0 0.0
  %273 = vmatpush1.msra.mxu0 0.0
  %274 = vmatprep.mubr.f32.mxu0 0.0
  %275 = vmatmul.mubr.f32.gmra.mrb[0].mxu0 %v53
  %v276 = vpop.f32.mrb[0].mxu0
  %v277 = vadd.f32 0.0, %v276
  %v278 = vpop.f32.mrb[0].mxu0
  %279 = vdwg.mxu0
  %v280 = vmul.f32 %v51, %v137
  %v281 = vmul.f32 %v52, %v207
  %v282 = vadd.f32 %v280, %v281
  %v283 = vmul.f32 %v53, %v277
  %v284 = vadd.f32 %v282, %v283
  %v285 = vmul.f32 %v137, %v137
  %v286 = vmul.f32 %v207, %v207
  %v287 = vadd.f32 %v285, %v286
  %v288 = vmul.f32 %v277, %v277
  %v289 = vadd.f32 %v287, %v288
  %v290 = vadd.f32 %v289, 1e-06
  %v291 = vrcp.pop %v290
  %v292 = vmul.f32 %v290, %v291
  %v293 = vsub.f32 2.0, %v292
  %v294 = vmul.f32 %v291, %v293
  %v295 = vmul.f32 %v284, %v294
  %vm296 = vcmp.ge.f32.partialorder %v284, 0.0
  %v297 = vsel %vm296, 0.0, %v295
  %v298 = vmul.f32 %v297, 0.8
  %v299 = vmul.f32 %v298, %v137
  %v300 = vsub.f32 %v51, %v299
  %v301 = vmul.f32 %v298, %v207
  %v302 = vsub.f32 %v52, %v301
  %v303 = vmul.f32 %v298, %v277
  %v304 = vsub.f32 %v53, %v303
  %v305 = vld [vmem:[%s3] sm:$0xff]
  %v306 = vld [vmem:[%s3 + $0x8] sm:$0xff]
  %v307 = vld [vmem:[%s3 + $0x10] sm:$0xff]
  %v308 = vld [vmem:[%s3 + $0x18] sm:$0xff]
  %v309 = vld [vmem:[%s3 + $0x20] sm:$0xff]
  %v310 = vld [vmem:[%s3 + $0x28] sm:$0xff]
  %v311 = vld [vmem:[%s3 + $0x30] sm:$0xff]
  %v312 = vld [vmem:[%s3 + $0x38] sm:$0xff]
  %v313 = vld [vmem:[%s3 + $0x40] sm:$0xff]
  %v314 = vld [vmem:[%s3 + $0x48] sm:$0xff]
  %v315 = vld [vmem:[%s3 + $0x50] sm:$0xff]
  %v316 = vld [vmem:[%s3 + $0x58] sm:$0xff]
  %v317 = vld [vmem:[%s3 + $0x60] sm:$0xff]
  %v318 = vld [vmem:[%s3 + $0x68] sm:$0xff]
  %v319 = vld [vmem:[%s3 + $0x70] sm:$0xff]
  %v320 = vld [vmem:[%s3 + $0x78] sm:$0xff]
  %321 = vmatprep.subr.mxu0 0.0
  %322 = vmatpush1.msra.mxu0 %v305
  %323 = vmatprep.subr.mxu0 0.0
  %324 = vmatpush1.msra.mxu0 %v306
  %325 = vmatprep.subr.mxu0 0.0
  %326 = vmatpush1.msra.mxu0 %v307
  %327 = vmatprep.subr.mxu0 0.0
  %328 = vmatpush1.msra.mxu0 %v308
  %329 = vmatprep.subr.mxu0 0.0
  %330 = vmatpush1.msra.mxu0 %v309
  %331 = vmatprep.subr.mxu0 0.0
  %332 = vmatpush1.msra.mxu0 %v310
  %333 = vmatprep.subr.mxu0 0.0
  %334 = vmatpush1.msra.mxu0 %v311
  %335 = vmatprep.subr.mxu0 0.0
  %336 = vmatpush1.msra.mxu0 %v312
  %337 = vmatprep.subr.mxu0 0.0
  %338 = vmatpush1.msra.mxu0 %v313
  %339 = vmatprep.subr.mxu0 0.0
  %340 = vmatpush1.msra.mxu0 %v314
  %341 = vmatprep.subr.mxu0 0.0
  %342 = vmatpush1.msra.mxu0 %v315
  %343 = vmatprep.subr.mxu0 0.0
  %344 = vmatpush1.msra.mxu0 %v316
  %345 = vmatprep.subr.mxu0 0.0
  %346 = vmatpush1.msra.mxu0 %v317
  %347 = vmatprep.subr.mxu0 0.0
  %348 = vmatpush1.msra.mxu0 %v318
  %349 = vmatprep.subr.mxu0 0.0
  %350 = vmatpush1.msra.mxu0 %v319
  %351 = vmatprep.subr.mxu0 0.0
  %352 = vmatpush1.msra.mxu0 %v320
  %353 = vmatprep.subr.mxu0 0.0
  %354 = vmatpush1.msra.mxu0 0.0
  %355 = vmatprep.subr.mxu0 0.0
  %356 = vmatpush1.msra.mxu0 0.0
  %357 = vmatprep.subr.mxu0 0.0
  %358 = vmatpush1.msra.mxu0 0.0
  %359 = vmatprep.subr.mxu0 0.0
  %360 = vmatpush1.msra.mxu0 0.0
  %361 = vmatprep.subr.mxu0 0.0
  %362 = vmatpush1.msra.mxu0 0.0
  %363 = vmatprep.subr.mxu0 0.0
  %364 = vmatpush1.msra.mxu0 0.0
  %365 = vmatprep.subr.mxu0 0.0
  %366 = vmatpush1.msra.mxu0 0.0
  %367 = vmatprep.subr.mxu0 0.0
  %368 = vmatpush1.msra.mxu0 0.0
  %369 = vmatprep.subr.mxu0 0.0
  %370 = vmatpush1.msra.mxu0 0.0
  %371 = vmatprep.subr.mxu0 0.0
  %372 = vmatpush1.msra.mxu0 0.0
  %373 = vmatprep.subr.mxu0 0.0
  %374 = vmatpush1.msra.mxu0 0.0
  %375 = vmatprep.subr.mxu0 0.0
  %376 = vmatpush1.msra.mxu0 0.0
  %377 = vmatprep.subr.mxu0 0.0
  %378 = vmatpush1.msra.mxu0 0.0
  %379 = vmatprep.subr.mxu0 0.0
  %380 = vmatpush1.msra.mxu0 0.0
  %381 = vmatprep.subr.mxu0 0.0
  %382 = vmatpush1.msra.mxu0 0.0
  %383 = vmatprep.subr.mxu0 0.0
  %384 = vmatpush1.msra.mxu0 0.0
  %385 = vmatprep.mubr.f32.mxu0 0.0
  %386 = vmatmul.mubr.f32.gmra.mrb[0].mxu0 %v300
  %v387 = vpop.f32.mrb[0].mxu0
  %v388 = vadd.f32 0.0, %v387
  %v389 = vpop.f32.mrb[0].mxu0
  %390 = vdwg.mxu0
  %v391 = vadd.f32 %v300, %v388
  %392 = vst [vmem:[%s4] sm:$0xff] %v391
  %393 = vmatprep.subr.mxu0 0.0
  %394 = vmatpush1.msra.mxu0 %v305
  %395 = vmatprep.subr.mxu0 0.0
  %396 = vmatpush1.msra.mxu0 %v306
  %397 = vmatprep.subr.mxu0 0.0
  %398 = vmatpush1.msra.mxu0 %v307
  %399 = vmatprep.subr.mxu0 0.0
  %400 = vmatpush1.msra.mxu0 %v308
  %401 = vmatprep.subr.mxu0 0.0
  %402 = vmatpush1.msra.mxu0 %v309
  %403 = vmatprep.subr.mxu0 0.0
  %404 = vmatpush1.msra.mxu0 %v310
  %405 = vmatprep.subr.mxu0 0.0
  %406 = vmatpush1.msra.mxu0 %v311
  %407 = vmatprep.subr.mxu0 0.0
  %408 = vmatpush1.msra.mxu0 %v312
  %409 = vmatprep.subr.mxu0 0.0
  %410 = vmatpush1.msra.mxu0 %v313
  %411 = vmatprep.subr.mxu0 0.0
  %412 = vmatpush1.msra.mxu0 %v314
  %413 = vmatprep.subr.mxu0 0.0
  %414 = vmatpush1.msra.mxu0 %v315
  %415 = vmatprep.subr.mxu0 0.0
  %416 = vmatpush1.msra.mxu0 %v316
  %417 = vmatprep.subr.mxu0 0.0
  %418 = vmatpush1.msra.mxu0 %v317
  %419 = vmatprep.subr.mxu0 0.0
  %420 = vmatpush1.msra.mxu0 %v318
  %421 = vmatprep.subr.mxu0 0.0
  %422 = vmatpush1.msra.mxu0 %v319
  %423 = vmatprep.subr.mxu0 0.0
  %424 = vmatpush1.msra.mxu0 %v320
  %425 = vmatprep.subr.mxu0 0.0
  %426 = vmatpush1.msra.mxu0 0.0
  %427 = vmatprep.subr.mxu0 0.0
  %428 = vmatpush1.msra.mxu0 0.0
  %429 = vmatprep.subr.mxu0 0.0
  %430 = vmatpush1.msra.mxu0 0.0
  %431 = vmatprep.subr.mxu0 0.0
  %432 = vmatpush1.msra.mxu0 0.0
  %433 = vmatprep.subr.mxu0 0.0
  %434 = vmatpush1.msra.mxu0 0.0
  %435 = vmatprep.subr.mxu0 0.0
  %436 = vmatpush1.msra.mxu0 0.0
  %437 = vmatprep.subr.mxu0 0.0
  %438 = vmatpush1.msra.mxu0 0.0
  %439 = vmatprep.subr.mxu0 0.0
  %440 = vmatpush1.msra.mxu0 0.0
  %441 = vmatprep.subr.mxu0 0.0
  %442 = vmatpush1.msra.mxu0 0.0
  %443 = vmatprep.subr.mxu0 0.0
  %444 = vmatpush1.msra.mxu0 0.0
  %445 = vmatprep.subr.mxu0 0.0
  %446 = vmatpush1.msra.mxu0 0.0
  %447 = vmatprep.subr.mxu0 0.0
  %448 = vmatpush1.msra.mxu0 0.0
  %449 = vmatprep.subr.mxu0 0.0
  %450 = vmatpush1.msra.mxu0 0.0
  %451 = vmatprep.subr.mxu0 0.0
  %452 = vmatpush1.msra.mxu0 0.0
  %453 = vmatprep.subr.mxu0 0.0
  %454 = vmatpush1.msra.mxu0 0.0
  %455 = vmatprep.subr.mxu0 0.0
  %456 = vmatpush1.msra.mxu0 0.0
  %457 = vmatprep.mubr.f32.mxu0 0.0
  %458 = vmatmul.mubr.f32.gmra.mrb[0].mxu0 %v302
  %v459 = vpop.f32.mrb[0].mxu0
  %v460 = vadd.f32 0.0, %v459
  %v461 = vpop.f32.mrb[0].mxu0
  %462 = vdwg.mxu0
  %v463 = vadd.f32 %v302, %v460
  %s464 = scalar_lea.vmem %s4, 8
  %465 = vst [vmem:[%s464] sm:$0xff] %v463
  %466 = vmatprep.subr.mxu0 0.0
  %467 = vmatpush1.msra.mxu0 %v305
  %468 = vmatprep.subr.mxu0 0.0
  %469 = vmatpush1.msra.mxu0 %v306
  %470 = vmatprep.subr.mxu0 0.0
  %471 = vmatpush1.msra.mxu0 %v307
  %472 = vmatprep.subr.mxu0 0.0
  %473 = vmatpush1.msra.mxu0 %v308
  %474 = vmatprep.subr.mxu0 0.0
  %475 = vmatpush1.msra.mxu0 %v309
  %476 = vmatprep.subr.mxu0 0.0
  %477 = vmatpush1.msra.mxu0 %v310
  %478 = vmatprep.subr.mxu0 0.0
  %479 = vmatpush1.msra.mxu0 %v311
  %480 = vmatprep.subr.mxu0 0.0
  %481 = vmatpush1.msra.mxu0 %v312
  %482 = vmatprep.subr.mxu0 0.0
  %483 = vmatpush1.msra.mxu0 %v313
  %484 = vmatprep.subr.mxu0 0.0
  %485 = vmatpush1.msra.mxu0 %v314
  %486 = vmatprep.subr.mxu0 0.0
  %487 = vmatpush1.msra.mxu0 %v315
  %488 = vmatprep.subr.mxu0 0.0
  %489 = vmatpush1.msra.mxu0 %v316
  %490 = vmatprep.subr.mxu0 0.0
  %491 = vmatpush1.msra.mxu0 %v317
  %492 = vmatprep.subr.mxu0 0.0
  %493 = vmatpush1.msra.mxu0 %v318
  %494 = vmatprep.subr.mxu0 0.0
  %495 = vmatpush1.msra.mxu0 %v319
  %496 = vmatprep.subr.mxu0 0.0
  %497 = vmatpush1.msra.mxu0 %v320
  %498 = vmatprep.subr.mxu0 0.0
  %499 = vmatpush1.msra.mxu0 0.0
  %500 = vmatprep.subr.mxu0 0.0
  %501 = vmatpush1.msra.mxu0 0.0
  %502 = vmatprep.subr.mxu0 0.0
  %503 = vmatpush1.msra.mxu0 0.0
  %504 = vmatprep.subr.mxu0 0.0
  %505 = vmatpush1.msra.mxu0 0.0
  %506 = vmatprep.subr.mxu0 0.0
  %507 = vmatpush1.msra.mxu0 0.0
  %508 = vmatprep.subr.mxu0 0.0
  %509 = vmatpush1.msra.mxu0 0.0
  %510 = vmatprep.subr.mxu0 0.0
  %511 = vmatpush1.msra.mxu0 0.0
  %512 = vmatprep.subr.mxu0 0.0
  %513 = vmatpush1.msra.mxu0 0.0
  %514 = vmatprep.subr.mxu0 0.0
  %515 = vmatpush1.msra.mxu0 0.0
  %516 = vmatprep.subr.mxu0 0.0
  %517 = vmatpush1.msra.mxu0 0.0
  %518 = vmatprep.subr.mxu0 0.0
  %519 = vmatpush1.msra.mxu0 0.0
  %520 = vmatprep.subr.mxu0 0.0
  %521 = vmatpush1.msra.mxu0 0.0
  %522 = vmatprep.subr.mxu0 0.0
  %523 = vmatpush1.msra.mxu0 0.0
  %524 = vmatprep.subr.mxu0 0.0
  %525 = vmatpush1.msra.mxu0 0.0
  %526 = vmatprep.subr.mxu0 0.0
  %527 = vmatpush1.msra.mxu0 0.0
  %528 = vmatprep.subr.mxu0 0.0
  %529 = vmatpush1.msra.mxu0 0.0
  %530 = vmatprep.mubr.f32.mxu0 0.0
  %531 = vmatmul.mubr.f32.gmra.mrb[0].mxu0 %v304
  %v532 = vpop.f32.mrb[0].mxu0
  %v533 = vadd.f32 0.0, %v532
  %v534 = vpop.f32.mrb[0].mxu0
  %535 = vdwg.mxu0
  %v536 = vadd.f32 %v304, %v533
  %s537 = scalar_lea.vmem %s4, 16
  %538 = vst [vmem:[%s537] sm:$0xff] %v536
  // Predicated region
  $region18: #{vn_residual_block.3} parent=0 // pred_check
    _
  $region19: #{vn_residual_block.3} parent=0 // pred_check_branch
    %540 = sbr.rel (0) target = $region21
  $region20: #{vn_residual_block.3} parent=0 // pred_region
    _
  $region21: #{vn_residual_block.3} parent=0 // pred_fallthru
    _
  // Predicated region
  $region22: #{vn_residual_block.3} parent=0 // pred_check
    _
  $region23: #{vn_residual_block.3} parent=0 // pred_check_branch
    %542 = sbr.rel (0) target = $region25
  $region24: #{vn_residual_block.3} parent=0 // pred_region
    _
  $region25: #{vn_residual_block.3} parent=0 // pred_fallthru
    _

</llo_original>
